<compile_context>
chip_gen: v5e
topology: v5e:2x2
jax: 0.10.0
libtpu: 0.0.40
codegen_flags: <defaults>
</compile_context>

<pallas_src>
import functools

import numpy as np
import jax
import jax.numpy as jnp
from jax.experimental import pallas as pl
from jax.experimental.pallas import tpu as pltpu


def _round_up(x, m):
    return (x + m - 1) // m * m


def _vmem_capacity_bytes():
    try:
        return int(pltpu.get_tpu_info().vmem_capacity_bytes)
    except Exception:
        return 64 << 20          # conservative default (v7x per-TensorCore)


# --------------------------------------------------------------------------
# Pallas kernel: per-(batch, frame-tile) sublane-folded partial sums of the
# three SSS loss terms, accumulated in a lane-wide VMEM scratch.
# --------------------------------------------------------------------------
def _sss_kernel(fr_ref, dft_ref, out_ref, acc_ref, *, n_pad, eps):
    t = pl.program_id(1)
    t_tile = fr_ref.shape[2]
    k_pad = fr_ref.shape[3]

    @pl.when(t == 0)
    def _():
        acc_ref[...] = jnp.zeros_like(acc_ref)

    # One MXU pass: [2*t_tile, K_pad] @ [K_pad, 2*n_pad]
    # (true|pred frames stacked on M, cos|sin DFT concatenated on N),
    # bf16 inputs, f32 accumulation.
    x = fr_ref[0].reshape(2 * t_tile, k_pad).astype(jnp.bfloat16)
    y = jnp.dot(x, dft_ref[...], preferred_element_type=jnp.float32)

    yt, yp = y[:t_tile], y[t_tile:]
    t_re, t_im = yt[:, :n_pad], yt[:, n_pad:]
    p_re, p_im = yp[:, :n_pad], yp[:, n_pad:]
    s_t = jnp.sqrt(t_re * t_re + t_im * t_im) + eps     # magnitude spec + eps
    s_p = jnp.sqrt(p_re * p_re + p_im * p_im) + eps

    diff = s_t - s_p                    # exactly 0 in padded rows/cols
    ssum = s_t + s_p                    # exactly 2*eps in padded rows/cols
    dlog = jnp.log(s_t) - jnp.log(s_p)  # exactly 0 in padded rows/cols (exact logs)

    # Sublane-folded partial sums (pure VPU vreg adds; no cross-lane XLU work).
    n_grp = t_tile // 8
    d2 = jnp.sum((diff * diff).reshape(n_grp, 8, n_pad), axis=0)
    s2 = jnp.sum((ssum * ssum).reshape(n_grp, 8, n_pad), axis=0)
    al = jnp.sum(jnp.abs(dlog).reshape(n_grp, 8, n_pad), axis=0)

    acc_ref[:, :n_pad] += d2
    acc_ref[:, n_pad:2 * n_pad] += s2
    acc_ref[:, 2 * n_pad:] += al

    @pl.when(t == pl.num_programs(1) - 1)
    def _():
        out_ref[0] = acc_ref[...]


# --------------------------------------------------------------------------
# Host-side construction: DFT matrix, framing, per-n_fft compiled function.
# --------------------------------------------------------------------------
def _dft_matrix(n_fft, k_pad, n_pad):
    """[K_pad, 2*n_pad] bf16: window-folded, normalized cos|sin, zero-padded."""
    n_freq = n_fft // 2 + 1
    n = np.arange(n_fft, dtype=np.float64)
    f = np.arange(n_freq, dtype=np.float64)
    w = 0.5 * (1.0 - np.cos(2.0 * np.pi * n / n_fft))   # periodic hann (torch default)
    ang = 2.0 * np.pi * np.outer(n, f) / n_fft
    norm = np.sqrt(np.sum(w * w))                       # Spectrogram(normalized=True)
    m = np.zeros((k_pad, 2 * n_pad), dtype=np.float32)
    m[:n_fft, :n_freq] = (w[:, None] * np.cos(ang)) / norm
    m[:n_fft, n_pad:n_pad + n_freq] = (w[:, None] * np.sin(ang)) / norm
    return jnp.asarray(m, dtype=jnp.bfloat16)


@functools.lru_cache(maxsize=None)
def _build_sss_fn(n_fft, B, L, alpha, eps):
    """Compile (once per n_fft / shape) a jitted SSS loss: (x_true, x_pred) -> scalar."""
    n_freq = n_fft // 2 + 1
    n_pad = _round_up(n_freq, 128)                       # lane-aligned freq columns
    k_pad = 128 if n_fft <= 128 else _round_up(n_fft, 256)   # MXU-aligned contraction

    # Frame bookkeeping reproducing F.pad(const) + stft(center=True, hop=n_fft)
    # with the first/last frame dropped: the kept frames are consecutive
    # non-overlapping windows lying fully inside the original signal.
    pad_total = 4 * (n_fft // 2)
    n_frames = 1 + (L + pad_total - n_fft) // n_fft
    T = n_frames - 2
    assert T >= 1, "signal too short for this n_fft"
    off = n_fft % 2                                      # odd n_fft frames start at sample 1

    # Per-generation VMEM sizing.
    vmem_cap = _vmem_capacity_bytes()
    vmem_budget = (3 * vmem_cap) // 4                    # never request all of VMEM
    dft_bytes = k_pad * 2 * n_pad * 2                    # single VMEM-resident bf16 copy
    t_max = 512 if vmem_cap >= (96 << 20) else 256       # bigger tiles on 128-MiB parts
    per_row = 20 * k_pad + 40 * n_pad                    # rough VMEM bytes per frame row
    cap_rows = max(16, (vmem_budget - dft_bytes - (6 << 20)) // per_row)
    t_tile = min(t_max, cap_rows)
    if T <= t_tile:
        t_tile = _round_up(T, 16)                        # 16: bf16 sublane-merge no-op
    elif t_tile >= 128:
        t_tile = (t_tile // 128) * 128                   # clean MXU M mapping (v5e)
    else:
        t_tile = max(16, (t_tile // 16) * 16)
    T_pad = _round_up(T, t_tile)
    num_t = T_pad // t_tile

    dft = _dft_matrix(n_fft, k_pad, n_pad)

    est = t_tile * per_row + dft_bytes + 2 * (8 * 3 * n_pad * 4) + (4 << 20)
    vmem_limit = int(min(max(est, 32 << 20), vmem_budget))

    kernel = functools.partial(_sss_kernel, n_pad=n_pad, eps=eps)

    grid_spec = pltpu.PrefetchScalarGridSpec(
        num_scalar_prefetch=0,
        grid=(B, num_t),
        in_specs=[
            pl.BlockSpec((1, 2, t_tile, k_pad), lambda b, t: (b, 0, t, 0)),
            # Whole DFT matrix resident in VMEM: one copy, not double-buffered.
            pl.BlockSpec(memory_space=pltpu.MemorySpace.VMEM),
        ],
        out_specs=pl.BlockSpec((1, 8, 3 * n_pad), lambda b, t: (b, 0, 0)),
        scratch_shapes=[pltpu.VMEM((8, 3 * n_pad), jnp.float32)],
    )

    # TODO(synk): for B == 1 on dual-TensorCore parts (v7x) additionally split
    # the frame axis across cores; with batch-only parallelism one core idles.
    call = pl.pallas_call(
        kernel,
        out_shape=jax.ShapeDtypeStruct((B, 8, 3 * n_pad), jnp.float32),
        grid_spec=grid_spec,
        compiler_params=pltpu.CompilerParams(
            dimension_semantics=("parallel", "arbitrary"),
            vmem_limit_bytes=vmem_limit),
    )

    # Exact correction: every padded (row, col) position contributes exactly
    # (2*eps)^2 to ||S_t + S_p||_F^2 and exactly 0 to the other two terms.
    den_corr = 4.0 * eps * eps * (T_pad * n_pad - T * n_freq)

    def frame(x):                                        # [B, L] f32 -> [B, T_pad, K_pad]
        fr = x[:, off: off + T * n_fft].reshape(B, T, n_fft)
        return jnp.pad(fr, ((0, 0), (0, T_pad - T), (0, k_pad - n_fft)))

    def fn(x_true, x_pred, dft_m):
        frames = jnp.stack(
            [frame(x_true.astype(jnp.float32)),
             frame(x_pred.astype(jnp.float32))], axis=1)          # [B, 2, T_pad, K_pad]
        parts = call(frames, dft_m)                               # [B, 8, 3*n_pad]
        num_sq = jnp.sum(parts[:, :, :n_pad], axis=(1, 2))        # ||S_t - S_p||_F^2
        den_sq = jnp.sum(parts[:, :, n_pad:2 * n_pad], axis=(1, 2)) - den_corr
        l1_sum = jnp.sum(parts[:, :, 2 * n_pad:])                 # sum |log S_t - log S_p|
        converge = jnp.mean(jnp.sqrt(num_sq) / jnp.sqrt(den_sq))
        log_term = l1_sum / (B * T * n_freq)                      # F.l1_loss 'mean'
        return converge + alpha * log_term

    jit_fn = jax.jit(fn)
    return lambda x_true, x_pred: jit_fn(x_true, x_pred, dft)


def sss_loss(x_true, x_pred, n_fft, alpha=1.0, eps=1e-7):
    # TODO(synk): STFT matmul runs in bf16 (f32 accumulation); torch uses f32
    # throughout — verify tolerance against the torch reference if parity matters.
    B, L = x_true.shape
    return _build_sss_fn(int(n_fft), int(B), int(L), float(alpha), float(eps))(
        x_true, x_pred)


def rss_loss(x_pred, x_true, *, fft_min, fft_max, n_scale, key,
             alpha=1.0, eps=1e-7):
    # TODO(synk): torch.randint's RNG stream is not reproducible here; only its
    # uniform-int-in-[fft_min, fft_max) semantics are (via jax.random).
    n_ffts = np.asarray(jax.random.randint(key, (n_scale,), fft_min, fft_max))
    value = jnp.float32(0.0)
    for n_fft in n_ffts:
        # note: RSSLoss.forward calls loss_func(x_true, x_pred)
        value = value + sss_loss(x_true, x_pred, int(n_fft),
                                 alpha=alpha, eps=eps)
    return value / n_scale


if __name__ == "__main__":
    key = jax.random.PRNGKey(0)
    k_pred, k_true, k_fft = jax.random.split(key, 3)
    B, L = 2, 256
    x_pred = jax.random.normal(k_pred, (B, L), jnp.float32)
    x_true = jax.random.normal(k_true, (B, L), jnp.float32)

    loss = rss_loss(x_pred, x_true,
                    fft_min=16, fft_max=32, n_scale=2, key=k_fft)
    loss = jax.block_until_ready(loss)
    assert jnp.isfinite(loss)
    print("KERNEL_OK")
</pallas_src>

<mosaic_0001>
module attributes {stable_mosaic.version = 11 : i64} {
  func.func @_sss_kernel(%arg0: i32, %arg1: i32, %arg2: memref<1x2x16x128xf32, #tpu.memory_space<vmem>>, %arg3: memref<128x256xbf16, #tpu.memory_space<vmem>>, %arg4: memref<1x8x384xf32, #tpu.memory_space<vmem>>, %arg5: memref<8x384xf32, #tpu.memory_space<vmem>>) attributes {dimension_semantics = [#tpu.dimension_semantics<parallel>, #tpu.dimension_semantics<arbitrary>], iteration_bounds = array<i64: 2, 1>, scalar_prefetch = 0 : i64, scratch_operands = 1 : i64, tpu.core_type = #tpu.core_type<tc>, window_params = [{transform_indices = @transform_0, window_bounds = array<i64: 1, 2, 16, 128>}, {pipeline_mode = #tpu.pipeline_mode<synchronous>, transform_indices = @transform_1, window_bounds = array<i64: 128, 256>}, {transform_indices = @transform_2, window_bounds = array<i64: 1, 8, 384>}]} {
    %c0_i32 = arith.constant 0 : i32
    %0 = arith.cmpi eq, %arg1, %c0_i32 : i32
    %1 = arith.extui %0 : i1 to i32
    %c0_i32_0 = arith.constant 0 : i32
    %2 = arith.cmpi ne, %1, %c0_i32_0 : i32
    scf.if %2 {
      %cst_23 = arith.constant 0.000000e+00 : f32
      %53 = vector.broadcast %cst_23 : f32 to vector<8x384xf32>
      %c0_24 = arith.constant 0 : index
      %c0_25 = arith.constant 0 : index
      %54 = vector.load %arg5[%c0_24, %c0_25] : memref<8x384xf32, #tpu.memory_space<vmem>>, vector<8x384xf32>
      tpu.vector_store %arg5[%c0_24, %c0_25], %53 {strides = array<i32>} : memref<8x384xf32, #tpu.memory_space<vmem>>, vector<8x384xf32>,
    } else {
    }
    %c0 = arith.constant 0 : index
    %c0_1 = arith.constant 0 : index
    %c0_2 = arith.constant 0 : index
    %c0_3 = arith.constant 0 : index
    %3 = vector.load %arg2[%c0, %c0_1, %c0_2, %c0_3] : memref<1x2x16x128xf32, #tpu.memory_space<vmem>>, vector<1x2x16x128xf32>
    %4 = vector.shape_cast %3 : vector<1x2x16x128xf32> to vector<2x16x128xf32>
    %5 = vector.shape_cast %4 : vector<2x16x128xf32> to vector<32x128xf32>
    %6 = arith.truncf %5 : vector<32x128xf32> to vector<32x128xbf16>
    %c0_4 = arith.constant 0 : index
    %c0_5 = arith.constant 0 : index
    %7 = vector.load %arg3[%c0_4, %c0_5] : memref<128x256xbf16, #tpu.memory_space<vmem>>, vector<128x256xbf16>
    %cst = arith.constant dense<0.000000e+00> : vector<32x256xf32>
    %8 = tpu.matmul %6, %7, %cst {dimension_numbers = #tpu.dot_dimension_numbers<[1], [0], [0], [1], [0, 0, 1, 1], [], []>} : vector<32x128xbf16>, vector<128x256xbf16>, vector<32x256xf32> -> vector<32x256xf32>
    %9 = vector.extract_strided_slice %8 {offsets = [0, 0], sizes = [16, 256], strides = [1, 1]} : vector<32x256xf32> to vector<16x256xf32>
    %10 = vector.extract_strided_slice %8 {offsets = [16, 0], sizes = [16, 256], strides = [1, 1]} : vector<32x256xf32> to vector<16x256xf32>
    %11 = vector.extract_strided_slice %9 {offsets = [0, 0], sizes = [16, 128], strides = [1, 1]} : vector<16x256xf32> to vector<16x128xf32>
    %12 = vector.extract_strided_slice %9 {offsets = [0, 128], sizes = [16, 128], strides = [1, 1]} : vector<16x256xf32> to vector<16x128xf32>
    %13 = vector.extract_strided_slice %10 {offsets = [0, 0], sizes = [16, 128], strides = [1, 1]} : vector<16x256xf32> to vector<16x128xf32>
    %14 = vector.extract_strided_slice %10 {offsets = [0, 128], sizes = [16, 128], strides = [1, 1]} : vector<16x256xf32> to vector<16x128xf32>
    %15 = arith.mulf %11, %11 : vector<16x128xf32>
    %16 = arith.mulf %12, %12 : vector<16x128xf32>
    %17 = arith.addf %15, %16 : vector<16x128xf32>
    %18 = math.sqrt %17 : vector<16x128xf32>
    %cst_6 = arith.constant 1.000000e-07 : f32
    %19 = vector.broadcast %cst_6 : f32 to vector<16x128xf32>
    %20 = arith.addf %18, %19 : vector<16x128xf32>
    %21 = arith.mulf %13, %13 : vector<16x128xf32>
    %22 = arith.mulf %14, %14 : vector<16x128xf32>
    %23 = arith.addf %21, %22 : vector<16x128xf32>
    %24 = math.sqrt %23 : vector<16x128xf32>
    %cst_7 = arith.constant 1.000000e-07 : f32
    %25 = vector.broadcast %cst_7 : f32 to vector<16x128xf32>
    %26 = arith.addf %24, %25 : vector<16x128xf32>
    %27 = arith.subf %20, %26 : vector<16x128xf32>
    %28 = arith.addf %20, %26 : vector<16x128xf32>
    %29 = math.log %20 : vector<16x128xf32>
    %30 = math.log %26 : vector<16x128xf32>
    %31 = arith.subf %29, %30 : vector<16x128xf32>
    %32 = arith.mulf %27, %27 : vector<16x128xf32>
    %33 = vector.shape_cast %32 : vector<16x128xf32> to vector<2x8x128xf32>
    %cst_8 = arith.constant dense<0.000000e+00> : vector<8x128xf32>
    %34 = vector.multi_reduction <add>, %33, %cst_8 [0] : vector<2x8x128xf32> to vector<8x128xf32>
    %35 = arith.mulf %28, %28 : vector<16x128xf32>
    %36 = vector.shape_cast %35 : vector<16x128xf32> to vector<2x8x128xf32>
    %cst_9 = arith.constant dense<0.000000e+00> : vector<8x128xf32>
    %37 = vector.multi_reduction <add>, %36, %cst_9 [0] : vector<2x8x128xf32> to vector<8x128xf32>
    %38 = math.absf %31 : vector<16x128xf32>
    %39 = vector.shape_cast %38 : vector<16x128xf32> to vector<2x8x128xf32>
    %cst_10 = arith.constant dense<0.000000e+00> : vector<8x128xf32>
    %40 = vector.multi_reduction <add>, %39, %cst_10 [0] : vector<2x8x128xf32> to vector<8x128xf32>
    %c0_11 = arith.constant 0 : index
    %c0_12 = arith.constant 0 : index
    %41 = vector.load %arg5[%c0_11, %c0_12] : memref<8x384xf32, #tpu.memory_space<vmem>>, vector<8x128xf32>
    %42 = arith.addf %41, %34 : vector<8x128xf32>
    %c0_13 = arith.constant 0 : index
    %c0_14 = arith.constant 0 : index
    %43 = vector.load %arg5[%c0_13, %c0_14] : memref<8x384xf32, #tpu.memory_space<vmem>>, vector<8x128xf32>
    tpu.vector_store %arg5[%c0_13, %c0_14], %42 {strides = array<i32>} : memref<8x384xf32, #tpu.memory_space<vmem>>, vector<8x128xf32>,
    %c0_15 = arith.constant 0 : index
    %c128 = arith.constant 128 : index
    %44 = vector.load %arg5[%c0_15, %c128] : memref<8x384xf32, #tpu.memory_space<vmem>>, vector<8x128xf32>
    %45 = arith.addf %44, %37 : vector<8x128xf32>
    %c0_16 = arith.constant 0 : index
    %c128_17 = arith.constant 128 : index
    %46 = vector.load %arg5[%c0_16, %c128_17] : memref<8x384xf32, #tpu.memory_space<vmem>>, vector<8x128xf32>
    tpu.vector_store %arg5[%c0_16, %c128_17], %45 {strides = array<i32>} : memref<8x384xf32, #tpu.memory_space<vmem>>, vector<8x128xf32>,
    %c0_18 = arith.constant 0 : index
    %c256 = arith.constant 256 : index
    %47 = vector.load %arg5[%c0_18, %c256] : memref<8x384xf32, #tpu.memory_space<vmem>>, vector<8x128xf32>
    %48 = arith.addf %47, %40 : vector<8x128xf32>
    %c0_19 = arith.constant 0 : index
    %c256_20 = arith.constant 256 : index
    %49 = vector.load %arg5[%c0_19, %c256_20] : memref<8x384xf32, #tpu.memory_space<vmem>>, vector<8x128xf32>
    tpu.vector_store %arg5[%c0_19, %c256_20], %48 {strides = array<i32>} : memref<8x384xf32, #tpu.memory_space<vmem>>, vector<8x128xf32>,
    %c0_i32_21 = arith.constant 0 : i32
    %50 = arith.cmpi eq, %arg1, %c0_i32_21 : i32
    %51 = arith.extui %50 : i1 to i32
    %c0_i32_22 = arith.constant 0 : i32
    %52 = arith.cmpi ne, %51, %c0_i32_22 : i32
    scf.if %52 {
      %c0_23 = arith.constant 0 : index
      %c0_24 = arith.constant 0 : index
      %53 = vector.load %arg5[%c0_23, %c0_24] : memref<8x384xf32, #tpu.memory_space<vmem>>, vector<8x384xf32>
      %c0_25 = arith.constant 0 : index
      %c0_26 = arith.constant 0 : index
      %c0_27 = arith.constant 0 : index
      %54 = vector.load %arg4[%c0_25, %c0_26, %c0_27] : memref<1x8x384xf32, #tpu.memory_space<vmem>>, vector<1x8x384xf32>
      %55 = vector.shape_cast %54 : vector<1x8x384xf32> to vector<8x384xf32>
      %56 = vector.shape_cast %53 : vector<8x384xf32> to vector<1x8x384xf32>
      tpu.vector_store %arg4[%c0_25, %c0_26, %c0_27], %56 {strides = array<i32>} : memref<1x8x384xf32, #tpu.memory_space<vmem>>, vector<1x8x384xf32>,
    } else {
    }
    return
  }
  func.func @transform_0(%arg0: i32, %arg1: i32) -> (i32, i32, i32, i32) {
    %c0_i32 = arith.constant 0 : i32
    %c0_i32_0 = arith.constant 0 : i32
    %c0_i32_1 = arith.constant 0 : i32
    return %arg0, %c0_i32, %arg1, %c0_i32_0 : i32, i32, i32, i32
  }
  func.func @transform_1(%arg0: i32, %arg1: i32) -> (i32, i32) {
    %c0_i32 = arith.constant 0 : i32
    %c0_i32_0 = arith.constant 0 : i32
    %c0_i32_1 = arith.constant 0 : i32
    return %c0_i32, %c0_i32_0 : i32, i32
  }
  func.func @transform_2(%arg0: i32, %arg1: i32) -> (i32, i32, i32) {
    %c0_i32 = arith.constant 0 : i32
    %c0_i32_0 = arith.constant 0 : i32
    %c0_i32_1 = arith.constant 0 : i32
    return %arg0, %c0_i32, %c0_i32_0 : i32, i32, i32
  }
}

</mosaic_0001>

<llo_original>
// kernel: fn.1
$region0: #{fn.1}
  #allocation0 [shape = 'u32[]', space=smem, size = 0x4, offset = 0x4, fixed_abs, tag = 'smem constant byte address 0x4 - core index']
  #allocation1 [shape = 'u32[72,128]{1,0:T(1,128)}', space=vmem, size = 0x9000, scoped, tag = 'internal scratch']
  #allocation2 [shape = 'f32[8,384]{1,0:T(8,128)}', space=vmem, size = 0x3000, scoped, tag = 'scratch operand']
  %s0 = inlined_call_operand.vmem [shape: f32[2,2,16,128], index: 0, kind: input, shape index: {}]
  %s1 = inlined_call_operand.vmem [shape: bf16[128,256], index: 1, kind: input, shape index: {}]
  %s2 = inlined_call_operand.vmem [shape: f32[2,8,384], index: 2, kind: output, shape index: {}]
  %s3 = sld [smem:[#allocation0]]
  $region49: #{fn.1} parent=0
    _
  %s5 = ssub.s32 1, %s3
  %s6 = scalar_select 0, %s5, %s3
  loop: start=0, step=1, limit=4
  $region2: #{fn.1} parent=0 // loop_pre_header
    _
  $region3: #{fn.1} parent=0 // loop_header
    %s8 = sphi 0, %s12
    %p9 = scmp.ge.s32.totalorder %s8, 4
    %s15 = sphi 0, %s27
    %s16 = sphi 0, %s23
    %s17 = sphi 0, %s15
    %s18 = sphi 0, %s16
    %s19 = sphi 0, %s17
    %s20 = sphi 0, %s18
    %s32 = sphi 0, %s34
    %s35 = sphi 0, %s32
    %s36 = sphi 0, %s35
    %s52 = sphi 0, %s36
    %s56 = sphi 0, %s56
    %s58 = sphi 0, %s56
    %s59 = sphi 0, %s58
    %s73 = sphi 0, %s59
    %s79 = sphi 0, %s81
    %s82 = sphi 0, %s79
    %s83 = sphi 0, %s82
    %s99 = sphi 0, %s83
  $region4: #{fn.1} parent=0 // loop_header_branch
    %11 = sbr.rel (%p9) target = $region8
  $region5: #{fn.1} parent=0 // loop_body
    %s13 = ssub.s32 %s8, 1
    %s14 = ssub.s32 %s8, 2
    %s21 = sadd.s32 1, %s16
    %p22 = scmp.ge.s32.totalorder %s21, 1
    %s23 = scalar_select %p22, 0, %s21
    %s24 = sadd.s32 1, %s15
    %s25 = scalar_select %p22, %s24, %s15
    %p26 = scmp.ge.s32.totalorder %s25, 2
    %s27 = scalar_select %p26, 0, %s25
    %s28 = ssub.s32 %s15, %s27
    %s29 = ssub.s32 %s16, %s23
    %s30 = sor.u32 %s28, %s29
    %p31 = scmp.eq.s32.totalorder %s30, 0
    %s33 = sadd.s32 %s32, 1
    %s34 = scalar_select %p31, %s32, %s33
    %p37 = pneg %p31
    %p38 = scmp.eq.s32.totalorder %s8, 1
    %p39 = por %p37, %p38
    %p40 = scmp.ne.s32.totalorder %s32, %s35
    %p41 = scmp.eq.s32.totalorder %s8, 0
    %p42 = por %p40, %p41
    %p43 = scmp.ne.s32.totalorder %s32, %s35
    %p44 = scmp.eq.s32.totalorder %s13, 1
    %p45 = por %p43, %p44
    %p46 = scmp.ne.s32.totalorder %s35, %s36
    %p47 = scmp.eq.s32.totalorder %s13, 0
    %p48 = por %p46, %p47
    %p49 = scmp.ne.s32.totalorder %s35, %s36
    %p50 = scmp.eq.s32.totalorder %s14, 1
    %p51 = por %p49, %p50
    %p53 = scmp.ne.s32.totalorder %s36, %s52
    %p54 = scmp.eq.s32.totalorder %s14, 0
    %p55 = por %p53, %p54
    %s57 = sadd.s32 %s56, 1
    %p60 = scmp.eq.s32.totalorder %s8, 1
    %p61 = scmp.ne.s32.totalorder %s56, %s58
    %p62 = scmp.eq.s32.totalorder %s8, 0
    %p63 = por %p61, %p62
    %p64 = scmp.ne.s32.totalorder %s56, %s58
    %p65 = scmp.eq.s32.totalorder %s13, 1
    %p66 = por %p64, %p65
    %p67 = scmp.ne.s32.totalorder %s58, %s59
    %p68 = scmp.eq.s32.totalorder %s13, 0
    %p69 = por %p67, %p68
    %p70 = scmp.ne.s32.totalorder %s58, %s59
    %p71 = scmp.eq.s32.totalorder %s14, 1
    %p72 = por %p70, %p71
    %p74 = scmp.ne.s32.totalorder %s59, %s73
    %p75 = scmp.eq.s32.totalorder %s14, 0
    %p76 = por %p74, %p75
    %s77 = ssub.s32 %s15, %s27
    %p78 = scmp.eq.s32.totalorder %s77, 0
    %s80 = sadd.s32 %s79, 1
    %s81 = scalar_select %p78, %s79, %s80
    %p84 = pneg %p78
    %p85 = scmp.eq.s32.totalorder %s8, 1
    %p86 = por %p84, %p85
    %p87 = scmp.ne.s32.totalorder %s79, %s82
    %p88 = scmp.eq.s32.totalorder %s8, 0
    %p89 = por %p87, %p88
    %p90 = scmp.ne.s32.totalorder %s79, %s82
    %p91 = scmp.eq.s32.totalorder %s13, 1
    %p92 = por %p90, %p91
    %p93 = scmp.ne.s32.totalorder %s82, %s83
    %p94 = scmp.eq.s32.totalorder %s13, 0
    %p95 = por %p93, %p94
    %p96 = scmp.ne.s32.totalorder %s82, %s83
    %p97 = scmp.eq.s32.totalorder %s14, 1
    %p98 = por %p96, %p97
    %p100 = scmp.ne.s32.totalorder %s83, %s99
    %p101 = scmp.eq.s32.totalorder %s14, 0
    %p102 = por %p100, %p101
    %p103 = scmp.le.s32.totalorder 1, %s8
    %p104 = scmp.lt.s32.totalorder %s8, 3
    %p105 = pnand %p103, %p104
    %p106 = pneg %p105
    // Predicated region
    $region9: #{fn.1} parent=5 // pred_check
      _
    $region10: #{fn.1} parent=5 // pred_check_branch
      %108 = sbr.rel (%p105) target = $region12
    $region11: #{fn.1} parent=5 // pred_region
      %s109 = ssub.s32 %s8, 1
      // Predicated region
      $region13: #{fn.1} parent=11 // pred_check
        %p110 = pneg %p69
      $region14: #{fn.1} parent=11 // pred_check_branch
        %112 = sbr.rel (%p110) target = $region16
      $region15: #{fn.1} parent=11 // pred_region
        _
      $region16: #{fn.1} parent=11 // pred_fallthru
        _
    $region12: #{fn.1} parent=5 // pred_fallthru
      _
    %p113 = scmp.lt.s32.totalorder %s8, 2
    // Predicated region
    $region17: #{fn.1} parent=5 // pred_check
      %p114 = pneg %p113
    $region18: #{fn.1} parent=5 // pred_check_branch
      %116 = sbr.rel (%p114) target = $region20
    $region19: #{fn.1} parent=5 // pred_region
      // Predicated region
      $region21: #{fn.1} parent=19 // pred_check
        %p117 = pneg %p42
      $region22: #{fn.1} parent=19 // pred_check_branch
        %119 = sbr.rel (%p117) target = $region24
      $region23: #{fn.1} parent=19 // pred_region
        %s120 = smul.u32 2, %s16
        %p121 = scmp.lt.s32.totalorder %s15, 1
        %s122 = scalar_select %p121, %s15, 1
        %p123 = scmp.lt.s32.totalorder %s120, 1
        %s124 = scalar_select %p123, %s120, 1
        %s125 = smul.addr %s122, 4
        %s126 = sadd.s32 %s124, %s125
        %s127 = smul.addr %s126, 8
        %s128 = scalar_lea.vmem %s0, %s127
        %s129 = smul.u32 2, %s16
      $region24: #{fn.1} parent=19 // pred_fallthru
        _
    $region20: #{fn.1} parent=5 // pred_fallthru
      _
    %p130 = scmp.le.s32.totalorder 1, %s8
    %p131 = scmp.lt.s32.totalorder %s8, 3
    %p132 = pnand %p130, %p131
    %p133 = pneg %p132
    // Predicated region
    $region25: #{fn.1} parent=5 // pred_check
      _
    $region26: #{fn.1} parent=5 // pred_check_branch
      %135 = sbr.rel (%p132) target = $region28
    $region27: #{fn.1} parent=5 // pred_region
      %s136 = ssub.s32 %s8, 1
      %s137 = smul.u32 2, %s18
      %p138 = scmp.lt.s32.totalorder %s17, 1
      %s139 = scalar_select %p138, %s17, 1
      %p140 = scmp.lt.s32.totalorder %s137, 1
      %s141 = scalar_select %p140, %s137, 1
      %s142 = smul.addr %s139, 4
      %s143 = sadd.s32 %s141, %s142
      %s144 = smul.addr %s143, 8
      %s145 = scalar_lea.vmem %s0, %s144
      %p146 = pneg %p48
      %p147 = pneg %p45
      %p148 = pneg %p69
      %p149 = pneg %p66
      %p150 = pneg %p95
      %p151 = pneg %p92
      %p152 = scmp.lt.s32.totalorder %s17, 1
      %s153 = scalar_select %p152, %s17, 1
      %s154 = smul.addr %s153, 3
      %s155 = smul.addr %s154, 8
      %s156 = scalar_lea.vmem %s2, %s155
      %s157 = smul.u32 2, %s18
      %p158 = scmp.lt.s32.totalorder %s17, 1
      %s159 = scalar_select %p158, %s17, 1
      %p160 = scmp.lt.s32.totalorder %s157, 1
      %s161 = scalar_select %p160, %s157, 1
      %s162 = smul.addr %s159, 4
      %s163 = sadd.s32 %s161, %s162
      %s164 = smul.addr %s163, 8
      %s165 = scalar_lea.vmem %s0, %s164
      %s166 = smul.u32 2, %s18
      %p167 = scmp.lt.s32.totalorder %s17, 1
      %s168 = scalar_select %p167, %s17, 1
      %s169 = smul.addr %s168, 3
      %s170 = smul.addr %s169, 8
      %s171 = scalar_lea.vmem %s2, %s170
      %p172 = scmp.eq.s32.totalorder %s18, 0
      // Predicated region
      $region29: #{fn.1} parent=27 // pred_check
        %p173 = pneg %p172
      $region30: #{fn.1} parent=27 // pred_check_branch
        %175 = sbr.rel (%p173) target = $region32
      $region31: #{fn.1} parent=27 // pred_region
        %176 = vst [vmem:[#allocation2] sm:$0xff] 0.0
        %177 = vst [vmem:[#allocation2 + $0x8] sm:$0xff] 0.0
        %178 = vst [vmem:[#allocation2 + $0x10] sm:$0xff] 0.0
      $region32: #{fn.1} parent=27 // pred_fallthru
        _
      %v179 = vld [vmem:[%s165] sm:$0xff]
      %v180 = vld [vmem:[%s165 + $0x8] sm:$0xff]
      %v181 = vld [vmem:[%s165 + $0x10] sm:$0xff]
      %v182 = vld [vmem:[%s165 + $0x18] sm:$0xff]
      %v183 = vpack.c.bf16 %v180, %v179
      %v184 = vpack.c.bf16 %v182, %v181
      %v185 = vld [vmem:[%s1] sm:$0xff]
      %v186 = vld [vmem:[%s1 + $0x8] sm:$0xff]
      %v187 = vld [vmem:[%s1 + $0x10] sm:$0xff]
      %v188 = vld [vmem:[%s1 + $0x18] sm:$0xff]
      %v189 = vld [vmem:[%s1 + $0x20] sm:$0xff]
      %v190 = vld [vmem:[%s1 + $0x28] sm:$0xff]
      %v191 = vld [vmem:[%s1 + $0x30] sm:$0xff]
      %v192 = vld [vmem:[%s1 + $0x38] sm:$0xff]
      %v193 = vld [vmem:[%s1 + $0x40] sm:$0xff]
      %v194 = vld [vmem:[%s1 + $0x48] sm:$0xff]
      %v195 = vld [vmem:[%s1 + $0x50] sm:$0xff]
      %v196 = vld [vmem:[%s1 + $0x58] sm:$0xff]
      %v197 = vld [vmem:[%s1 + $0x60] sm:$0xff]
      %v198 = vld [vmem:[%s1 + $0x68] sm:$0xff]
      %v199 = vld [vmem:[%s1 + $0x70] sm:$0xff]
      %v200 = vld [vmem:[%s1 + $0x78] sm:$0xff]
      %v217 = vunpack.c.l.b16 %v185
      %v218 = vunpack.c.h.b16 %v185
      %v219 = vunpack.c.l.b16 %v186
      %v220 = vunpack.c.h.b16 %v186
      %v221 = vunpack.c.l.b16 %v187
      %v222 = vunpack.c.h.b16 %v187
      %v223 = vunpack.c.l.b16 %v188
      %v224 = vunpack.c.h.b16 %v188
      %v225 = vunpack.c.l.b16 %v189
      %v226 = vunpack.c.h.b16 %v189
      %v227 = vunpack.c.l.b16 %v190
      %v228 = vunpack.c.h.b16 %v190
      %v229 = vunpack.c.l.b16 %v191
      %v230 = vunpack.c.h.b16 %v191
      %v231 = vunpack.c.l.b16 %v192
      %v232 = vunpack.c.h.b16 %v192
      %v233 = vunpack.c.l.b16 %v193
      %v234 = vunpack.c.h.b16 %v193
      %v235 = vunpack.c.l.b16 %v194
      %v236 = vunpack.c.h.b16 %v194
      %v237 = vunpack.c.l.b16 %v195
      %v238 = vunpack.c.h.b16 %v195
      %v239 = vunpack.c.l.b16 %v196
      %v240 = vunpack.c.h.b16 %v196
      %v241 = vunpack.c.l.b16 %v197
      %v242 = vunpack.c.h.b16 %v197
      %v243 = vunpack.c.l.b16 %v198
      %v244 = vunpack.c.h.b16 %v198
      %v245 = vunpack.c.l.b16 %v199
      %v246 = vunpack.c.h.b16 %v199
      %v247 = vunpack.c.l.b16 %v200
      %v248 = vunpack.c.h.b16 %v200
      %v249 = vpack.c.b16 %v219, %v217
      %v250 = vpack.c.b16 %v220, %v218
      %v251 = vpack.c.b16 %v223, %v221
      %v252 = vpack.c.b16 %v224, %v222
      %v253 = vpack.c.b16 %v227, %v225
      %v254 = vpack.c.b16 %v228, %v226
      %v255 = vpack.c.b16 %v231, %v229
      %v256 = vpack.c.b16 %v232, %v230
      %v257 = vpack.c.b16 %v235, %v233
      %v258 = vpack.c.b16 %v236, %v234
      %v259 = vpack.c.b16 %v239, %v237
      %v260 = vpack.c.b16 %v240, %v238
      %v261 = vpack.c.b16 %v243, %v241
      %v262 = vpack.c.b16 %v244, %v242
      %v263 = vpack.c.b16 %v247, %v245
      %v264 = vpack.c.b16 %v248, %v246
      %281 = vmatpush.bf16.msra.mxu0 %v263
      %282 = vmatpush.bf16.msra.mxu0 %v261
      %283 = vmatpush.bf16.msra.mxu0 %v259
      %284 = vmatpush.bf16.msra.mxu0 %v257
      %285 = vmatpush.bf16.msra.mxu0 %v255
      %286 = vmatpush.bf16.msra.mxu0 %v253
      %287 = vmatpush.bf16.msra.mxu0 %v251
      %288 = vmatpush.bf16.msra.mxu0 %v249
      %289 = vmatmul.bf16.gmra.mxu0 %v183
      %v290 = vpop.f32.mrf.mxu0
      %v291 = vadd.f32 0.0, %v290
      %v292 = vpop.f32.mrf.mxu0
      %v293 = vadd.f32 0.0, %v292
      %294 = vmatmul.bf16.gmra.mxu0 %v184
      %v295 = vpop.f32.mrf.mxu0
      %v296 = vadd.f32 0.0, %v295
      %v297 = vpop.f32.mrf.mxu0
      %v298 = vadd.f32 0.0, %v297
      %299 = vdwg.mxu0
      %300 = vmatpush.bf16.msra.mxu0 %v264
      %301 = vmatpush.bf16.msra.mxu0 %v262
      %302 = vmatpush.bf16.msra.mxu0 %v260
      %303 = vmatpush.bf16.msra.mxu0 %v258
      %304 = vmatpush.bf16.msra.mxu0 %v256
      %305 = vmatpush.bf16.msra.mxu0 %v254
      %306 = vmatpush.bf16.msra.mxu0 %v252
      %307 = vmatpush.bf16.msra.mxu0 %v250
      %308 = vmatmul.bf16.gmra.mxu0 %v183
      %v309 = vpop.f32.mrf.mxu0
      %v310 = vadd.f32 0.0, %v309
      %v311 = vpop.f32.mrf.mxu0
      %v312 = vadd.f32 0.0, %v311
      %313 = vmatmul.bf16.gmra.mxu0 %v184
      %v314 = vpop.f32.mrf.mxu0
      %v315 = vadd.f32 0.0, %v314
      %v316 = vpop.f32.mrf.mxu0
      %v317 = vadd.f32 0.0, %v316
      %318 = vdwg.mxu0
      %v319 = vmul.f32 %v291, %v291
      %v320 = vmul.f32 %v293, %v293
      %v321 = vmul.f32 %v310, %v310
      %v322 = vmul.f32 %v312, %v312
      %v323 = vadd.f32 %v319, %v321
      %v324 = vadd.f32 %v320, %v322
      %v325 = vrsqrt.pop %v323
      %v326 = vmul.f32 %v325, %v323
      %v327 = vmul.f32 %v326, %v325
      %v328 = vmul.f32 0.5, %v327
      %v329 = vsub.f32 1.5, %v328
      %v330 = vmul.f32 %v325, %v329
      %v331 = vmul.f32 %v323, %v330
      %vm332 = vcmp.eq.f32.partialorder %v323, inf
      %v333 = vsel %vm332, %v323, %v331
      %vm334 = vcmp.eq.f32.partialorder %v323, 0.0
      %v335 = vand.u32 %v323, 2147483648
      %v336 = vsel %vm334, %v335, %v333
      %v337 = vrsqrt.pop %v324
      %v338 = vmul.f32 %v337, %v324
      %v339 = vmul.f32 %v338, %v337
      %v340 = vmul.f32 0.5, %v339
      %v341 = vsub.f32 1.5, %v340
      %v342 = vmul.f32 %v337, %v341
      %v343 = vmul.f32 %v324, %v342
      %vm344 = vcmp.eq.f32.partialorder %v324, inf
      %v345 = vsel %vm344, %v324, %v343
      %vm346 = vcmp.eq.f32.partialorder %v324, 0.0
      %v347 = vand.u32 %v324, 2147483648
      %v348 = vsel %vm346, %v347, %v345
      %v349 = vadd.f32 %v336, 1e-07
      %v350 = vadd.f32 %v348, 1e-07
      %v351 = vmul.f32 %v296, %v296
      %v352 = vmul.f32 %v298, %v298
      %v353 = vmul.f32 %v315, %v315
      %v354 = vmul.f32 %v317, %v317
      %v355 = vadd.f32 %v351, %v353
      %v356 = vadd.f32 %v352, %v354
      %v357 = vrsqrt.pop %v355
      %v358 = vmul.f32 %v357, %v355
      %v359 = vmul.f32 %v358, %v357
      %v360 = vmul.f32 0.5, %v359
      %v361 = vsub.f32 1.5, %v360
      %v362 = vmul.f32 %v357, %v361
      %v363 = vmul.f32 %v355, %v362
      %vm364 = vcmp.eq.f32.partialorder %v355, inf
      %v365 = vsel %vm364, %v355, %v363
      %vm366 = vcmp.eq.f32.partialorder %v355, 0.0
      %v367 = vand.u32 %v355, 2147483648
      %v368 = vsel %vm366, %v367, %v365
      %v369 = vrsqrt.pop %v356
      %v370 = vmul.f32 %v369, %v356
      %v371 = vmul.f32 %v370, %v369
      %v372 = vmul.f32 0.5, %v371
      %v373 = vsub.f32 1.5, %v372
      %v374 = vmul.f32 %v369, %v373
      %v375 = vmul.f32 %v356, %v374
      %vm376 = vcmp.eq.f32.partialorder %v356, inf
      %v377 = vsel %vm376, %v356, %v375
      %vm378 = vcmp.eq.f32.partialorder %v356, 0.0
      %v379 = vand.u32 %v356, 2147483648
      %v380 = vsel %vm378, %v379, %v377
      %v381 = vadd.f32 %v368, 1e-07
      %v382 = vadd.f32 %v380, 1e-07
      %v383 = vsub.f32 %v349, %v381
      %v384 = vsub.f32 %v350, %v382
      %v385 = vadd.f32 %v349, %v381
      %v386 = vadd.f32 %v350, %v382
      %v387 = vlog2.pop %v349
      %v388 = vmul.f32 %v387, 0.6931472
      %v389 = vlog2.pop %v350
      %v390 = vmul.f32 %v389, 0.6931472
      %v391 = vlog2.pop %v381
      %v392 = vmul.f32 %v391, 0.6931472
      %v393 = vlog2.pop %v382
      %v394 = vmul.f32 %v393, 0.6931472
      %v395 = vsub.f32 %v388, %v392
      %v396 = vsub.f32 %v390, %v394
      %v397 = vmul.f32 %v383, %v383
      %v398 = vmul.f32 %v384, %v384
      %v399 = vadd.f32 %v397, %v398
      %v400 = vmul.f32 %v385, %v385
      %v401 = vmul.f32 %v386, %v386
      %v402 = vadd.f32 %v400, %v401
      %v403 = vand.u32 2147483647, %v395
      %v404 = vand.u32 2147483647, %v396
      %v405 = vadd.f32 %v403, %v404
      %v406 = vld [vmem:[#allocation2] sm:$0xff]
      %v407 = vadd.f32 %v406, %v399
      %408 = vst [vmem:[#allocation2] sm:$0xff] %v407
      %v409 = vld [vmem:[#allocation2 + $0x8] sm:$0xff]
      %v410 = vadd.f32 %v409, %v402
      %411 = vst [vmem:[#allocation2 + $0x8] sm:$0xff] %v410
      %v412 = vld [vmem:[#allocation2 + $0x10] sm:$0xff]
      %v413 = vadd.f32 %v412, %v405
      %414 = vst [vmem:[#allocation2 + $0x10] sm:$0xff] %v413
      // Predicated region
      $region33: #{fn.1} parent=27 // pred_check
        %p415 = pneg %p172
      $region34: #{fn.1} parent=27 // pred_check_branch
        %417 = sbr.rel (%p415) target = $region36
      $region35: #{fn.1} parent=27 // pred_region
        %v418 = vld [vmem:[#allocation2] sm:$0xff]
        %v419 = vld [vmem:[#allocation2 + $0x8] sm:$0xff]
        %v420 = vld [vmem:[#allocation2 + $0x10] sm:$0xff]
        %421 = vst [vmem:[%s171] sm:$0xff] %v418
        %422 = vst [vmem:[%s171 + $0x8] sm:$0xff] %v419
        %423 = vst [vmem:[%s171 + $0x10] sm:$0xff] %v420
      $region36: #{fn.1} parent=27 // pred_fallthru
        _
      %p424 = scmp.lt.s32.totalorder %s17, 1
      %s425 = scalar_select %p424, %s17, 1
      %s426 = smul.addr %s425, 3
      %s427 = smul.addr %s426, 8
      %s428 = scalar_lea.vmem %s2, %s427
      // Predicated region
      $region37: #{fn.1} parent=27 // pred_check
        %p429 = pneg %p92
      $region38: #{fn.1} parent=27 // pred_check_branch
        %431 = sbr.rel (%p429) target = $region40
      $region39: #{fn.1} parent=27 // pred_region
        _
      $region40: #{fn.1} parent=27 // pred_fallthru
        _
    $region28: #{fn.1} parent=5 // pred_fallthru
      _
    %p432 = scmp.le.s32.totalorder 2, %s8
    // Predicated region
    $region41: #{fn.1} parent=5 // pred_check
      %p433 = pneg %p432
    $region42: #{fn.1} parent=5 // pred_check_branch
      %435 = sbr.rel (%p433) target = $region44
    $region43: #{fn.1} parent=5 // pred_region
      %s436 = ssub.s32 %s8, 2
      // Predicated region
      $region45: #{fn.1} parent=43 // pred_check
        %p437 = pneg %p98
      $region46: #{fn.1} parent=43 // pred_check_branch
        %439 = sbr.rel (%p437) target = $region48
      $region47: #{fn.1} parent=43 // pred_region
        %p440 = scmp.lt.s32.totalorder %s19, 1
        %s441 = scalar_select %p440, %s19, 1
        %s442 = smul.addr %s441, 3
        %s443 = smul.addr %s442, 8
        %s444 = scalar_lea.vmem %s2, %s443
      $region48: #{fn.1} parent=43 // pred_fallthru
        _
    $region44: #{fn.1} parent=5 // pred_fallthru
      _
  $region6: #{fn.1} parent=0 // loop_footer
    %s12 = sadd.s32 1, %s8
  $region7: #{fn.1} parent=0 // loop_footer_branch
    %7 = sbr.rel target = $region3
  $region8: #{fn.1} parent=0 // loop_exit
    _

</llo_original>
